<compile_context>
chip_gen: v6e
topology: v6e:2x2x1
jax: 0.10.0
libtpu: 0.0.40
codegen_flags: <defaults>
</compile_context>

<pallas_src>
import jax
import jax.numpy as jnp
from jax.experimental import pallas as pl
from jax.experimental.pallas import tpu as pltpu

_LANE = 128
_SUBLANE = 8
_TARGET_BLOCK_ELEMS = 512 * 1024  # ~2 MiB of f32 per block (1-4 MiB plateau)
_MIN_GRID = 4                     # >= 2 pipelined steps per v7x TensorCore


def _sigmoid_kernel(x_ref, o_ref):
    x = x_ref[...].astype(jnp.float32)
    # Direct, overflow-safe sigmoid in f32:
    #   x << 0 : exp(-x) -> inf, 1/(1+inf) -> 0   (no NaN, matches reference)
    #   x >> 0 : exp(-x) -> 0,   result -> 1
    # exp lowers to the EUP slot; the divide is exact (keeps 1e-6 tolerance).
    o_ref[...] = (1.0 / (1.0 + jnp.exp(-x))).astype(o_ref.dtype)


def _round_up(v: int, m: int) -> int:
    return ((v + m - 1) // m) * m


def _choose_blocks(rows: int, cols: int):
    """Pick (block_rows, block_cols) for an (rows, cols) f32 view.

    Block last dim: full `cols` (always legal) or a 128-multiple chunk.
    Block row dim: multiple of 8 (or full `rows`), sized so blocks stay in the
    ~2 MiB class and the total grid has an even count of >= _MIN_GRID steps.
    """
    # --- lane (last) axis -------------------------------------------------
    if cols * _SUBLANE <= _TARGET_BLOCK_ELEMS or cols <= _LANE:
        block_cols = cols                                   # full dim: legal
    else:
        block_cols = max(_LANE,
                         (_TARGET_BLOCK_ELEMS // _SUBLANE) // _LANE * _LANE)
    col_blocks = pl.cdiv(cols, block_cols)

    # --- sublane (row) axis -------------------------------------------------
    if rows <= 2 * _SUBLANE:
        return rows, block_cols                              # tiny: one block

    max_rows = max(_SUBLANE,
                   (_TARGET_BLOCK_ELEMS // block_cols) // _SUBLANE * _SUBLANE)
    want_row_blocks = max(pl.cdiv(_MIN_GRID, col_blocks), pl.cdiv(rows, max_rows))
    if want_row_blocks % 2:
        want_row_blocks += 1                                 # balance 2 TCs
    block_rows = min(max_rows, _round_up(pl.cdiv(rows, want_row_blocks), _SUBLANE))
    # Best-effort nudge toward an even row-block count (v7x load balance).
    if pl.cdiv(rows, block_rows) % 2 and block_rows > _SUBLANE:
        alt = block_rows - _SUBLANE
        if pl.cdiv(rows, alt) % 2 == 0:
            block_rows = alt
    return block_rows, block_cols


def _sigmoid_2d(x2d, out_dtype):
    rows, cols = x2d.shape
    block_rows, block_cols = _choose_blocks(rows, cols)
    grid = (pl.cdiv(rows, block_rows), pl.cdiv(cols, block_cols))
    return pl.pallas_call(
        _sigmoid_kernel,
        out_shape=jax.ShapeDtypeStruct((rows, cols), out_dtype),
        grid_spec=pltpu.PrefetchScalarGridSpec(
            num_scalar_prefetch=0,
            grid=grid,
            in_specs=[pl.BlockSpec((block_rows, block_cols), lambda i, j: (i, j))],
            out_specs=pl.BlockSpec((block_rows, block_cols), lambda i, j: (i, j)),
        ),
        compiler_params=pltpu.CompilerParams(
            dimension_semantics=("parallel", "parallel"),
            # ~2 MiB blocks, double-buffered in+out ~= 8 MiB; 32 MiB gives
            # ample headroom on v5e's 16 MiB scoped default and fits v7x.
            vmem_limit_bytes=32 * 1024 * 1024,
        ),
    )(x2d)


@jax.jit
def sigmoid_pallas(x):
    """Elementwise sigmoid over an arbitrary-shaped array via a Pallas kernel."""
    orig_shape = x.shape
    n = x.size
    out_dtype = jnp.float32  # torch.empty(shape) defaults to float32

    if n == 0:
        return jnp.zeros(orig_shape, out_dtype)

    if n % _LANE == 0:
        # Fast path: lane-dense view, unmasked 128-wide stores. Free reshape.
        x2d = jnp.ravel(x).reshape(-1, _LANE)
    elif x.ndim >= 2:
        # Collapse leading dims; partial lane/row edge blocks are masked by
        # the cdiv grid — no pad, no slice, no extra HBM traffic.
        x2d = x.reshape(-1, orig_shape[-1])
    else:
        x2d = x.reshape(1, -1)

    out2d = _sigmoid_2d(x2d, out_dtype)
    return out2d.reshape(orig_shape)


if __name__ == "__main__":
    key = jax.random.PRNGKey(0)
    x = jax.random.normal(key, (2, 4, 16, 16), dtype=jnp.float32) * 4.0

    out = jax.block_until_ready(sigmoid_pallas(x))
    ref = jax.nn.sigmoid(x)
    assert out.shape == x.shape
    assert out.dtype == jnp.float32
    assert jnp.allclose(out, ref, atol=1e-6), "mismatch vs reference sigmoid"

    # Exercise the non-128-multiple (masked edge-block) path as well.
    x_odd = jax.random.normal(jax.random.PRNGKey(0), (3, 7, 11), jnp.float32) * 4.0
    out_odd = jax.block_until_ready(sigmoid_pallas(x_odd))
    assert jnp.allclose(out_odd, jax.nn.sigmoid(x_odd), atol=1e-6)

    # TODO(synk): update_module_input_grad (backward pass) is not part of the
    # forward spec and is not implemented here.
    print("KERNEL_OK")
</pallas_src>

<mosaic_0001>
module attributes {stable_mosaic.version = 11 : i64} {
  func.func @_sigmoid_kernel(%arg0: i32, %arg1: i32, %arg2: memref<16x128xf32, #tpu.memory_space<vmem>>, %arg3: memref<16x128xf32, #tpu.memory_space<vmem>>) attributes {dimension_semantics = [#tpu.dimension_semantics<parallel>, #tpu.dimension_semantics<parallel>], iteration_bounds = array<i64: 1, 1>, scalar_prefetch = 0 : i64, scratch_operands = 0 : i64, tpu.core_type = #tpu.core_type<tc>, window_params = [{transform_indices = @transform_0, window_bounds = array<i64: 16, 128>}, {transform_indices = @transform_1, window_bounds = array<i64: 16, 128>}]} {
    %c0 = arith.constant 0 : index
    %c0_0 = arith.constant 0 : index
    %0 = vector.load %arg2[%c0, %c0_0] : memref<16x128xf32, #tpu.memory_space<vmem>>, vector<16x128xf32>
    %cst = arith.constant 0.000000e+00 : f32
    %1 = vector.broadcast %cst : f32 to vector<16x128xf32>
    %2 = arith.subf %1, %0 : vector<16x128xf32>
    %3 = math.exp %2 : vector<16x128xf32>
    %cst_1 = arith.constant 1.000000e+00 : f32
    %4 = vector.broadcast %cst_1 : f32 to vector<16x128xf32>
    %5 = arith.addf %4, %3 : vector<16x128xf32>
    %cst_2 = arith.constant 1.000000e+00 : f32
    %6 = vector.broadcast %cst_2 : f32 to vector<16x128xf32>
    %7 = arith.divf %6, %5 : vector<16x128xf32>
    %c0_3 = arith.constant 0 : index
    %c0_4 = arith.constant 0 : index
    %8 = vector.load %arg3[%c0_3, %c0_4] : memref<16x128xf32, #tpu.memory_space<vmem>>, vector<16x128xf32>
    tpu.vector_store %arg3[%c0_3, %c0_4], %7 {strides = array<i32>} : memref<16x128xf32, #tpu.memory_space<vmem>>, vector<16x128xf32>,
    return
  }
  func.func @transform_0(%arg0: i32, %arg1: i32) -> (i32, i32) {
    %c0_i32 = arith.constant 0 : i32
    return %arg0, %arg1 : i32, i32
  }
  func.func @transform_1(%arg0: i32, %arg1: i32) -> (i32, i32) {
    %c0_i32 = arith.constant 0 : i32
    return %arg0, %arg1 : i32, i32
  }
}

</mosaic_0001>

<llo_original>
// kernel: sigmoid_pallas.1
$region0: #{sigmoid_pallas.1}
  #allocation0 [shape = 'u32[]', space=smem, size = 0x4, offset = 0x4, fixed_abs, tag = 'smem constant byte address 0x4 - core index']
  #allocation1 [shape = 'u32[144,128]{1,0:T(1,128)}', space=vmem, size = 0x12000, scoped, tag = 'internal scratch']
  %s0 = inlined_call_operand.vmem [shape: f32[16,128], index: 0, kind: input, shape index: {}]
  %s1 = inlined_call_operand.vmem [shape: f32[16,128], index: 1, kind: output, shape index: {}]
  %s2 = sld [smem:[#allocation0]]
  $region14: #{sigmoid_pallas.1} parent=0
    _
  %s4 = ssub.s32 1, %s2
  %s5 = scalar_select 0, %s4, %s2
  // Predicated region
  $region2: #{sigmoid_pallas.1} parent=0 // pred_check
    _
  $region3: #{sigmoid_pallas.1} parent=0 // pred_check_branch
    %7 = sbr.rel (0) target = $region5
  $region4: #{sigmoid_pallas.1} parent=0 // pred_region
    _
  $region5: #{sigmoid_pallas.1} parent=0 // pred_fallthru
    _
  %v8 = vld [vmem:[%s0] sm:$0xff]
  %v9 = vld [vmem:[%s0 + $0x8] sm:$0xff]
  %v10 = vsub.f32 0.0, %v8
  %v11 = vsub.f32 0.0, %v9
  %v12 = vmul.f32 %v10, 1.442695
  %v13 = vpow.pop %v12
  %v14 = vmul.f32 %v11, 1.442695
  %v15 = vpow.pop %v14
  %v16 = vadd.f32 %v13, 1.0
  %v17 = vadd.f32 %v15, 1.0
  %v18 = vrcp.pop %v16
  %v19 = vmul.f32 1.0, %v18
  %v20 = vrcp.pop %v17
  %v21 = vmul.f32 1.0, %v20
  %22 = vst [vmem:[%s1] sm:$0xff] %v19
  %23 = vst [vmem:[%s1 + $0x8] sm:$0xff] %v21
  // Predicated region
  $region6: #{sigmoid_pallas.1} parent=0 // pred_check
    _
  $region7: #{sigmoid_pallas.1} parent=0 // pred_check_branch
    %25 = sbr.rel (0) target = $region9
  $region8: #{sigmoid_pallas.1} parent=0 // pred_region
    _
  $region9: #{sigmoid_pallas.1} parent=0 // pred_fallthru
    _
  // Predicated region
  $region10: #{sigmoid_pallas.1} parent=0 // pred_check
    _
  $region11: #{sigmoid_pallas.1} parent=0 // pred_check_branch
    %27 = sbr.rel (0) target = $region13
  $region12: #{sigmoid_pallas.1} parent=0 // pred_region
    _
  $region13: #{sigmoid_pallas.1} parent=0 // pred_fallthru
    _

</llo_original>
